<compile_context>
chip_gen: v5e
topology: v5e:2x2
jax: 0.10.0
libtpu: 0.0.40
codegen_flags: <defaults>
</compile_context>

<pallas_src>
import jax
import jax.numpy as jnp
from jax.experimental import pallas as pl
from jax.experimental.pallas import tpu as pltpu

# ----------------------------- model config ---------------------------------
H = 16
W = 16
IN_CH = 3
IN_DIM = IN_CH * H * W          # 768 (multiple of 128 -> lane aligned)
HIDDEN_DIM = 128                # lane-aligned hidden size
NUM_LAYERS = 3                  # residual hidden blocks
NUM_CLASSES = 6
OUT_PAD = 128                   # lane-dense padded class dimension


def _round_up(x, m):
    return ((x + m - 1) // m) * m


def _tiling_config():
    """Per-generation (batch tile, scoped-VMEM limit).

    v5e/v6e have 128 MiB physical VMEM -> big tiles amortize per-step overhead;
    v7x has 64 MiB -> cap the tile and leave headroom.
    """
    try:
        cap = pltpu.get_tpu_info().vmem_capacity_bytes
    except Exception:
        cap = 64 * 1024 * 1024                  # conservative fallback (v7x per-TC)
    if cap >= 100 * 1024 * 1024:                # v5e / v6e (128 MiB)
        return 4096, 96 * 1024 * 1024
    return 2048, 48 * 1024 * 1024               # v7x (64 MiB)


TB_MAX, VMEM_LIMIT_BYTES = _tiling_config()


# ------------------------------ Pallas kernel --------------------------------
def _mlp_resid_kernel(x_ref, w_in_ref, b_in_ref, w_hid_ref, b_hid_ref,
                      w_out_ref, b_out_ref, out_ref):
    # x_ref:     (TB, IN_DIM)                          f32 (streamed)
    # w_in_ref:  (IN_DIM, HIDDEN_DIM)                  bf16 (resident)
    # b_in_ref:  (1, HIDDEN_DIM)                       f32
    # w_hid_ref: (NUM_LAYERS, HIDDEN_DIM, HIDDEN_DIM)  bf16
    # b_hid_ref: (NUM_LAYERS, 1, HIDDEN_DIM)           f32
    # w_out_ref: (HIDDEN_DIM, OUT_PAD)                 bf16 (zero-padded cols)
    # b_out_ref: (1, OUT_PAD)                          f32  (zero-padded cols)
    # out_ref:   (TB, OUT_PAD)                         bf16 (lane-dense store)

    # Cast x to bf16 on the VPU (hidden under the x DMA) instead of a separate
    # XLA pass that re-reads/writes the whole x stream in HBM.
    x = x_ref[...].astype(jnp.bfloat16)

    # Hoisted bias loads (avoid re-reading refs in the unrolled loop).
    b_in = b_in_ref[...]                # (1, HIDDEN_DIM) f32
    b_hid = b_hid_ref[...]              # (NUM_LAYERS, 1, HIDDEN_DIM) f32

    # Input projection + ReLU (bf16 MXU operands, f32 accumulation).
    h = jnp.dot(x, w_in_ref[...], preferred_element_type=jnp.float32)
    h = jnp.maximum(h + b_in, 0.0)

    # Residual hidden blocks (static unroll; NUM_LAYERS is small & fixed).
    for l in range(NUM_LAYERS):
        z = jnp.dot(h.astype(jnp.bfloat16), w_hid_ref[l],
                    preferred_element_type=jnp.float32)
        h = h + jnp.maximum(z + b_hid[l], 0.0)

    # Output head -> lane-dense (TB, 128) bf16 store; real logits in cols [:6].
    logits = jnp.dot(h.astype(jnp.bfloat16), w_out_ref[...],
                     preferred_element_type=jnp.float32)
    out_ref[...] = (logits + b_out_ref[...]).astype(out_ref.dtype)


# --------------------------- one-time weight packing --------------------------
def pack_params(params):
    """bf16 matmul weights + lane-padded (128-wide) head; run once, not per call."""
    return {
        "w_in": params["w_in"].astype(jnp.bfloat16),
        "b_in": params["b_in"].astype(jnp.float32),
        "w_hid": params["w_hid"].astype(jnp.bfloat16),
        "b_hid": params["b_hid"].astype(jnp.float32),
        "w_out": jnp.pad(params["w_out"],
                         ((0, 0), (0, OUT_PAD - NUM_CLASSES))).astype(jnp.bfloat16),
        "b_out": jnp.pad(params["b_out"],
                         ((0, 0), (0, OUT_PAD - NUM_CLASSES))).astype(jnp.float32),
    }


# ------------------------------- wrapper -------------------------------------
def mlp_classifier_deep_residual(x_nchw, packed):
    """x_nchw: (B, 3, H, W) float32 -> (B, NUM_CLASSES) bfloat16 logits."""
    b = x_nchw.shape[0]

    # Free row-major metadata reshape == torch .view(b, -1); no dtype cast here
    # (the f32 -> bf16 cast happens on-chip inside the kernel).
    x_flat = x_nchw.reshape(b, -1)

    # Batch tile: multiple of 8 sublanes; aim for >= 2 grid steps when possible
    # so the "parallel" axis covers both v7x TensorCores. No batch padding:
    # Pallas masks the partial last block itself.
    b8 = _round_up(b, 8)
    tb = min(TB_MAX, max(8, _round_up((b8 + 1) // 2, 8)))
    grid = (pl.cdiv(b, tb),)

    const2 = lambda i: (0, 0)
    const3 = lambda i: (0, 0, 0)

    out_padded = pl.pallas_call(
        _mlp_resid_kernel,
        out_shape=jax.ShapeDtypeStruct((b, OUT_PAD), jnp.bfloat16),
        grid=grid,
        in_specs=[
            pl.BlockSpec((tb, IN_DIM), lambda i: (i, 0)),                 # x (streamed)
            pl.BlockSpec((IN_DIM, HIDDEN_DIM), const2),                   # w_in (resident)
            pl.BlockSpec((1, HIDDEN_DIM), const2),                        # b_in
            pl.BlockSpec((NUM_LAYERS, HIDDEN_DIM, HIDDEN_DIM), const3),   # w_hid
            pl.BlockSpec((NUM_LAYERS, 1, HIDDEN_DIM), const3),            # b_hid
            pl.BlockSpec((HIDDEN_DIM, OUT_PAD), const2),                  # w_out
            pl.BlockSpec((1, OUT_PAD), const2),                           # b_out
        ],
        out_specs=pl.BlockSpec((tb, OUT_PAD), lambda i: (i, 0)),
        compiler_params=pltpu.CompilerParams(
            dimension_semantics=("parallel",),
            vmem_limit_bytes=VMEM_LIMIT_BYTES),
    )(x_flat, packed["w_in"], packed["b_in"], packed["w_hid"],
      packed["b_hid"], packed["w_out"], packed["b_out"])

    # TODO(synk): fuse this narrow slice into the downstream consumer (loss /
    # argmax) instead of a standalone XLA slice that re-reads the padded logits.
    return out_padded[:, :NUM_CLASSES]


# --------------------------- deterministic params ----------------------------
def init_params(key):
    k = jax.random.split(key, 6)

    def lin_init(kk, fan_in, shape):
        bound = 1.0 / jnp.sqrt(fan_in)
        return jax.random.uniform(kk, shape, jnp.float32, -bound, bound)

    return {
        "w_in":  lin_init(k[0], IN_DIM, (IN_DIM, HIDDEN_DIM)),
        "b_in":  lin_init(k[1], IN_DIM, (1, HIDDEN_DIM)),
        "w_hid": lin_init(k[2], HIDDEN_DIM, (NUM_LAYERS, HIDDEN_DIM, HIDDEN_DIM)),
        "b_hid": lin_init(k[3], HIDDEN_DIM, (NUM_LAYERS, 1, HIDDEN_DIM)),
        "w_out": lin_init(k[4], HIDDEN_DIM, (HIDDEN_DIM, NUM_CLASSES)),
        "b_out": lin_init(k[5], HIDDEN_DIM, (1, NUM_CLASSES)),
    }


# ------------------------------ reference (JAX) -------------------------------
def ref_forward(x_nchw, p):
    """Same algorithm with identical bf16-matmul / f32-elementwise precision.

    Note: the kernel emits bf16 logits (halved writeback), so the reference
    applies the same final rounding.
    """
    x = x_nchw.reshape(x_nchw.shape[0], -1).astype(jnp.bfloat16)
    w_in = p["w_in"].astype(jnp.bfloat16)
    w_hid = p["w_hid"].astype(jnp.bfloat16)
    w_out = p["w_out"].astype(jnp.bfloat16)

    h = jnp.dot(x, w_in, preferred_element_type=jnp.float32) + p["b_in"]
    h = jnp.maximum(h, 0.0)
    for l in range(NUM_LAYERS):
        z = jnp.dot(h.astype(jnp.bfloat16), w_hid[l],
                    preferred_element_type=jnp.float32) + p["b_hid"][l]
        h = h + jnp.maximum(z, 0.0)
    logits = jnp.dot(h.astype(jnp.bfloat16), w_out,
                     preferred_element_type=jnp.float32) + p["b_out"]
    return logits.astype(jnp.bfloat16)


if __name__ == "__main__":
    key = jax.random.PRNGKey(0)
    kx, kp = jax.random.split(key)

    x = jax.random.normal(kx, (2, IN_CH, H, W), jnp.float32)
    params = init_params(kp)
    packed = pack_params(params)            # one-time weight packing

    logits = mlp_classifier_deep_residual(x, packed)
    jax.block_until_ready(logits)

    expected = ref_forward(x, params)
    assert logits.shape == (2, NUM_CLASSES), logits.shape
    assert logits.dtype == jnp.bfloat16, logits.dtype
    diff = jnp.max(jnp.abs(logits.astype(jnp.float32) - expected.astype(jnp.float32)))
    assert jnp.allclose(logits.astype(jnp.float32), expected.astype(jnp.float32),
                        atol=1e-2, rtol=1e-2), diff

    print("KERNEL_OK")
</pallas_src>

<mosaic_0001>
module attributes {stable_mosaic.version = 11 : i64} {
  func.func @_mlp_resid_kernel(%arg0: i32, %arg1: memref<8x768xf32, #tpu.memory_space<vmem>>, %arg2: memref<768x128xbf16, #tpu.memory_space<vmem>>, %arg3: memref<1x128xf32, #tpu.memory_space<vmem>>, %arg4: memref<3x128x128xbf16, #tpu.memory_space<vmem>>, %arg5: memref<3x1x128xf32, #tpu.memory_space<vmem>>, %arg6: memref<128x128xbf16, #tpu.memory_space<vmem>>, %arg7: memref<1x128xf32, #tpu.memory_space<vmem>>, %arg8: memref<8x128xbf16, #tpu.memory_space<vmem>>) attributes {dimension_semantics = [#tpu.dimension_semantics<parallel>], iteration_bounds = array<i64: 1>, scalar_prefetch = 0 : i64, scratch_operands = 0 : i64, tpu.core_type = #tpu.core_type<tc>, window_params = [{transform_indices = @transform_0, window_bounds = array<i64: 8, 768>}, {pipeline_mode = #tpu.pipeline_mode<synchronous>, transform_indices = @transform_1, window_bounds = array<i64: 768, 128>}, {pipeline_mode = #tpu.pipeline_mode<synchronous>, transform_indices = @transform_2, window_bounds = array<i64: 1, 128>}, {pipeline_mode = #tpu.pipeline_mode<synchronous>, transform_indices = @transform_3, window_bounds = array<i64: 3, 128, 128>}, {pipeline_mode = #tpu.pipeline_mode<synchronous>, transform_indices = @transform_4, window_bounds = array<i64: 3, 1, 128>}, {pipeline_mode = #tpu.pipeline_mode<synchronous>, transform_indices = @transform_5, window_bounds = array<i64: 128, 128>}, {pipeline_mode = #tpu.pipeline_mode<synchronous>, transform_indices = @transform_6, window_bounds = array<i64: 1, 128>}, {transform_indices = @transform_7, window_bounds = array<i64: 8, 128>}]} {
    %c0 = arith.constant 0 : index
    %c0_0 = arith.constant 0 : index
    %0 = vector.load %arg1[%c0, %c0_0] : memref<8x768xf32, #tpu.memory_space<vmem>>, vector<8x768xf32>
    %1 = arith.truncf %0 : vector<8x768xf32> to vector<8x768xbf16>
    %c0_1 = arith.constant 0 : index
    %c0_2 = arith.constant 0 : index
    %2 = vector.load %arg3[%c0_1, %c0_2] : memref<1x128xf32, #tpu.memory_space<vmem>>, vector<1x128xf32>
    %c0_3 = arith.constant 0 : index
    %c0_4 = arith.constant 0 : index
    %c0_5 = arith.constant 0 : index
    %3 = vector.load %arg5[%c0_3, %c0_4, %c0_5] : memref<3x1x128xf32, #tpu.memory_space<vmem>>, vector<3x1x128xf32>
    %c0_6 = arith.constant 0 : index
    %c0_7 = arith.constant 0 : index
    %4 = vector.load %arg2[%c0_6, %c0_7] : memref<768x128xbf16, #tpu.memory_space<vmem>>, vector<768x128xbf16>
    %cst = arith.constant dense<0.000000e+00> : vector<8x128xf32>
    %5 = tpu.matmul %1, %4, %cst {dimension_numbers = #tpu.dot_dimension_numbers<[1], [0], [0], [1], [0, 0, 1, 1], [], []>} : vector<8x768xbf16>, vector<768x128xbf16>, vector<8x128xf32> -> vector<8x128xf32>
    %6 = vector.broadcast %2 : vector<1x128xf32> to vector<8x128xf32>
    %7 = arith.addf %5, %6 : vector<8x128xf32>
    %cst_8 = arith.constant 0.000000e+00 : f32
    %8 = vector.broadcast %cst_8 : f32 to vector<8x128xf32>
    %9 = arith.maximumf %7, %8 : vector<8x128xf32>
    %10 = arith.truncf %9 : vector<8x128xf32> to vector<8x128xbf16>
    %c0_9 = arith.constant 0 : index
    %c0_10 = arith.constant 0 : index
    %c0_11 = arith.constant 0 : index
    %11 = vector.load %arg4[%c0_9, %c0_10, %c0_11] : memref<3x128x128xbf16, #tpu.memory_space<vmem>>, vector<1x128x128xbf16>
    %12 = vector.shape_cast %11 : vector<1x128x128xbf16> to vector<128x128xbf16>
    %cst_12 = arith.constant dense<0.000000e+00> : vector<8x128xf32>
    %13 = tpu.matmul %10, %12, %cst_12 {dimension_numbers = #tpu.dot_dimension_numbers<[1], [0], [0], [1], [0, 0, 1, 1], [], []>} : vector<8x128xbf16>, vector<128x128xbf16>, vector<8x128xf32> -> vector<8x128xf32>
    %14 = vector.extract_strided_slice %3 {offsets = [0, 0, 0], sizes = [1, 1, 128], strides = [1, 1, 1]} : vector<3x1x128xf32> to vector<1x1x128xf32>
    %15 = vector.shape_cast %14 : vector<1x1x128xf32> to vector<1x128xf32>
    %16 = vector.broadcast %15 : vector<1x128xf32> to vector<8x128xf32>
    %17 = arith.addf %13, %16 : vector<8x128xf32>
    %cst_13 = arith.constant 0.000000e+00 : f32
    %18 = vector.broadcast %cst_13 : f32 to vector<8x128xf32>
    %19 = arith.maximumf %17, %18 : vector<8x128xf32>
    %20 = arith.addf %9, %19 : vector<8x128xf32>
    %21 = arith.truncf %20 : vector<8x128xf32> to vector<8x128xbf16>
    %c1 = arith.constant 1 : index
    %c0_14 = arith.constant 0 : index
    %c0_15 = arith.constant 0 : index
    %22 = vector.load %arg4[%c1, %c0_14, %c0_15] : memref<3x128x128xbf16, #tpu.memory_space<vmem>>, vector<1x128x128xbf16>
    %23 = vector.shape_cast %22 : vector<1x128x128xbf16> to vector<128x128xbf16>
    %cst_16 = arith.constant dense<0.000000e+00> : vector<8x128xf32>
    %24 = tpu.matmul %21, %23, %cst_16 {dimension_numbers = #tpu.dot_dimension_numbers<[1], [0], [0], [1], [0, 0, 1, 1], [], []>} : vector<8x128xbf16>, vector<128x128xbf16>, vector<8x128xf32> -> vector<8x128xf32>
    %25 = vector.extract_strided_slice %3 {offsets = [1, 0, 0], sizes = [1, 1, 128], strides = [1, 1, 1]} : vector<3x1x128xf32> to vector<1x1x128xf32>
    %26 = vector.shape_cast %25 : vector<1x1x128xf32> to vector<1x128xf32>
    %27 = vector.broadcast %26 : vector<1x128xf32> to vector<8x128xf32>
    %28 = arith.addf %24, %27 : vector<8x128xf32>
    %cst_17 = arith.constant 0.000000e+00 : f32
    %29 = vector.broadcast %cst_17 : f32 to vector<8x128xf32>
    %30 = arith.maximumf %28, %29 : vector<8x128xf32>
    %31 = arith.addf %20, %30 : vector<8x128xf32>
    %32 = arith.truncf %31 : vector<8x128xf32> to vector<8x128xbf16>
    %c2 = arith.constant 2 : index
    %c0_18 = arith.constant 0 : index
    %c0_19 = arith.constant 0 : index
    %33 = vector.load %arg4[%c2, %c0_18, %c0_19] : memref<3x128x128xbf16, #tpu.memory_space<vmem>>, vector<1x128x128xbf16>
    %34 = vector.shape_cast %33 : vector<1x128x128xbf16> to vector<128x128xbf16>
    %cst_20 = arith.constant dense<0.000000e+00> : vector<8x128xf32>
    %35 = tpu.matmul %32, %34, %cst_20 {dimension_numbers = #tpu.dot_dimension_numbers<[1], [0], [0], [1], [0, 0, 1, 1], [], []>} : vector<8x128xbf16>, vector<128x128xbf16>, vector<8x128xf32> -> vector<8x128xf32>
    %36 = vector.extract_strided_slice %3 {offsets = [2, 0, 0], sizes = [1, 1, 128], strides = [1, 1, 1]} : vector<3x1x128xf32> to vector<1x1x128xf32>
    %37 = vector.shape_cast %36 : vector<1x1x128xf32> to vector<1x128xf32>
    %38 = vector.broadcast %37 : vector<1x128xf32> to vector<8x128xf32>
    %39 = arith.addf %35, %38 : vector<8x128xf32>
    %cst_21 = arith.constant 0.000000e+00 : f32
    %40 = vector.broadcast %cst_21 : f32 to vector<8x128xf32>
    %41 = arith.maximumf %39, %40 : vector<8x128xf32>
    %42 = arith.addf %31, %41 : vector<8x128xf32>
    %43 = arith.truncf %42 : vector<8x128xf32> to vector<8x128xbf16>
    %c0_22 = arith.constant 0 : index
    %c0_23 = arith.constant 0 : index
    %44 = vector.load %arg6[%c0_22, %c0_23] : memref<128x128xbf16, #tpu.memory_space<vmem>>, vector<128x128xbf16>
    %cst_24 = arith.constant dense<0.000000e+00> : vector<8x128xf32>
    %45 = tpu.matmul %43, %44, %cst_24 {dimension_numbers = #tpu.dot_dimension_numbers<[1], [0], [0], [1], [0, 0, 1, 1], [], []>} : vector<8x128xbf16>, vector<128x128xbf16>, vector<8x128xf32> -> vector<8x128xf32>
    %c0_25 = arith.constant 0 : index
    %c0_26 = arith.constant 0 : index
    %46 = vector.load %arg7[%c0_25, %c0_26] : memref<1x128xf32, #tpu.memory_space<vmem>>, vector<1x128xf32>
    %47 = vector.broadcast %46 : vector<1x128xf32> to vector<8x128xf32>
    %48 = arith.addf %45, %47 : vector<8x128xf32>
    %49 = arith.truncf %48 : vector<8x128xf32> to vector<8x128xbf16>
    %c0_27 = arith.constant 0 : index
    %c0_28 = arith.constant 0 : index
    %50 = vector.load %arg8[%c0_27, %c0_28] : memref<8x128xbf16, #tpu.memory_space<vmem>>, vector<8x128xbf16>
    tpu.vector_store %arg8[%c0_27, %c0_28], %49 {strides = array<i32>} : memref<8x128xbf16, #tpu.memory_space<vmem>>, vector<8x128xbf16>,
    return
  }
  func.func @transform_0(%arg0: i32) -> (i32, i32) {
    %c0_i32 = arith.constant 0 : i32
    %c0_i32_0 = arith.constant 0 : i32
    return %arg0, %c0_i32 : i32, i32
  }
  func.func @transform_1(%arg0: i32) -> (i32, i32) {
    %c0_i32 = arith.constant 0 : i32
    %c0_i32_0 = arith.constant 0 : i32
    %c0_i32_1 = arith.constant 0 : i32
    return %c0_i32, %c0_i32_0 : i32, i32
  }
  func.func @transform_2(%arg0: i32) -> (i32, i32) {
    %c0_i32 = arith.constant 0 : i32
    %c0_i32_0 = arith.constant 0 : i32
    %c0_i32_1 = arith.constant 0 : i32
    return %c0_i32, %c0_i32_0 : i32, i32
  }
  func.func @transform_3(%arg0: i32) -> (i32, i32, i32) {
    %c0_i32 = arith.constant 0 : i32
    %c0_i32_0 = arith.constant 0 : i32
    %c0_i32_1 = arith.constant 0 : i32
    %c0_i32_2 = arith.constant 0 : i32
    return %c0_i32, %c0_i32_0, %c0_i32_1 : i32, i32, i32
  }
  func.func @transform_4(%arg0: i32) -> (i32, i32, i32) {
    %c0_i32 = arith.constant 0 : i32
    %c0_i32_0 = arith.constant 0 : i32
    %c0_i32_1 = arith.constant 0 : i32
    %c0_i32_2 = arith.constant 0 : i32
    return %c0_i32, %c0_i32_0, %c0_i32_1 : i32, i32, i32
  }
  func.func @transform_5(%arg0: i32) -> (i32, i32) {
    %c0_i32 = arith.constant 0 : i32
    %c0_i32_0 = arith.constant 0 : i32
    %c0_i32_1 = arith.constant 0 : i32
    return %c0_i32, %c0_i32_0 : i32, i32
  }
  func.func @transform_6(%arg0: i32) -> (i32, i32) {
    %c0_i32 = arith.constant 0 : i32
    %c0_i32_0 = arith.constant 0 : i32
    %c0_i32_1 = arith.constant 0 : i32
    return %c0_i32, %c0_i32_0 : i32, i32
  }
  func.func @transform_7(%arg0: i32) -> (i32, i32) {
    %c0_i32 = arith.constant 0 : i32
    %c0_i32_0 = arith.constant 0 : i32
    return %arg0, %c0_i32 : i32, i32
  }
}

</mosaic_0001>

<llo_original>
// kernel: tpu_custom_call.1
$region0: #{tpu_custom_call.1}
  #allocation0 [shape = 'u32[]', space=smem, size = 0x4, offset = 0x4, fixed_abs, tag = 'smem constant byte address 0x4 - core index']
  #allocation1 [shape = 'u32[72,128]{1,0:T(1,128)}', space=vmem, size = 0x9000, scoped, tag = 'internal scratch']
  %s0 = inlined_call_operand.hbm [shape: f32[2,768], index: 0, kind: input, shape index: {}]
  %s1 = inlined_call_operand.hbm [shape: bf16[768,128], index: 1, kind: input, shape index: {}]
  %s2 = inlined_call_operand.hbm [shape: f32[1,128], index: 2, kind: input, shape index: {}]
  %s3 = inlined_call_operand.hbm [shape: bf16[3,128,128], index: 3, kind: input, shape index: {}]
  %s4 = inlined_call_operand.vmem [shape: f32[3,1,128], index: 4, kind: input, shape index: {}]
  %s5 = inlined_call_operand.hbm [shape: bf16[128,128], index: 5, kind: input, shape index: {}]
  %s6 = inlined_call_operand.vmem [shape: f32[1,128], index: 6, kind: input, shape index: {}]
  %s7 = inlined_call_operand.hbm [shape: bf16[2,128], index: 7, kind: output, shape index: {}]
  %s8 = sld [smem:[#allocation0]]
  $region58: #{tpu_custom_call.1} parent=0
    _
  %s10 = ssub.s32 1, %s8
  %s11 = scalar_select 0, %s10, %s8
  $region1: #{tpu_custom_call.1} parent=0
    #allocation2 [shape = 'u8[24576]{0}', space=vmem, size = 0x6000, scoped, tag = 'input window, operand 0, single buffered']
    #allocation3 [shape = 's32[1]{0}', space=sflag, size = 0x4, scoped, tag = 'scoped memory for tpu_custom_call.1']
    #allocation4 [shape = 's32[1]{0}', space=sflag, size = 0x4, scoped, tag = 'scoped memory for tpu_custom_call.1']
    #allocation5 [shape = 'u8[196608]{0}', space=vmem, size = 0x30000, scoped, tag = 'input window, operand 1, single buffered']
    #allocation6 [shape = 's32[1]{0}', space=sflag, size = 0x4, scoped, tag = 'scoped memory for tpu_custom_call.1']
    #allocation7 [shape = 'u8[512]{0}', space=vmem, size = 0x400, scoped, tag = 'input window, operand 2, single buffered']
    #allocation8 [shape = 'u8[98304]{0}', space=vmem, size = 0x18000, scoped, tag = 'input window, operand 3, single buffered']
    #allocation9 [shape = 's32[1]{0}', space=sflag, size = 0x4, scoped, tag = 'scoped memory for tpu_custom_call.1']
    #allocation10 [shape = 'u8[32768]{0}', space=vmem, size = 0x8000, scoped, tag = 'input window, operand 5, single buffered']
    #allocation11 [shape = 'u8[2048]{0}', space=vmem, size = 0x800, scoped, tag = 'output window, operand 0, single buffered']
    %12 = vsyncpa [#allocation3], 0
    %13 = vsyncpa [#allocation6], 0
    %14 = vsyncpa [#allocation9], 0
    %15 = vsyncpa [#allocation4], 0
    // Predicated region
    $region2: #{tpu_custom_call.1} parent=1 // pred_check
      _
    $region3: #{tpu_custom_call.1} parent=1 // pred_check_branch
      %17 = sbr.rel (0) target = $region5
    $region4: #{tpu_custom_call.1} parent=1 // pred_region
      %19 = vsyncadd [#allocation3], 576
      %s20 = sshll.u32 %s0, 4
      %s21 = int_to_ptr.hbm [resolvable:$true] %s20
      %s22 = sshll.u32 [#allocation2], 4
      %s23 = int_to_ptr.vmem [resolvable:$true] %s22
      %28 = dma.hbm_to_vmem [thread:$0]  %s21, 192, %s23, [#allocation3], 192, 192, 12
    $region5: #{tpu_custom_call.1} parent=1 // pred_fallthru
      _
    // Predicated region
    $region6: #{tpu_custom_call.1} parent=1 // pred_check
      _
    $region7: #{tpu_custom_call.1} parent=1 // pred_check_branch
      %30 = sbr.rel (0) target = $region9
    $region8: #{tpu_custom_call.1} parent=1 // pred_region
      %32 = vsyncadd [#allocation6], 0
      %s33 = sshll.u32 %s1, 4
      %s34 = int_to_ptr.hbm [resolvable:$true] %s33
      %s35 = sshll.u32 [#allocation5], 4
      %s36 = int_to_ptr.vmem [resolvable:$true] %s35
      %41 = dma.hbm_to_vmem [thread:$0]  %s34, 6144, %s36, [#allocation6], 64, 64, 4
    $region9: #{tpu_custom_call.1} parent=1 // pred_fallthru
      _
    // Predicated region
    $region10: #{tpu_custom_call.1} parent=1 // pred_check
      _
    $region11: #{tpu_custom_call.1} parent=1 // pred_check_branch
      %43 = sbr.rel (0) target = $region13
    $region12: #{tpu_custom_call.1} parent=1 // pred_region
      %45 = vsyncadd [#allocation6], 0
      %s47 = sshll.u32 %s2, 4
      %s48 = int_to_ptr.hbm [resolvable:$true] %s47
      %s49 = sshll.u32 [#allocation7], 4
      %s50 = int_to_ptr.vmem [resolvable:$true] %s49
      %52 = dma.hbm_to_vmem [thread:$0]  %s48, 16, %s50, [#allocation6]
    $region13: #{tpu_custom_call.1} parent=1 // pred_fallthru
      _
    // Predicated region
    $region14: #{tpu_custom_call.1} parent=1 // pred_check
      _
    $region15: #{tpu_custom_call.1} parent=1 // pred_check_branch
      %54 = sbr.rel (0) target = $region17
    $region16: #{tpu_custom_call.1} parent=1 // pred_region
      %56 = vsyncadd [#allocation9], 0
      %s57 = sshll.u32 %s3, 4
      %s58 = int_to_ptr.hbm [resolvable:$true] %s57
      %s59 = sshll.u32 [#allocation8], 4
      %s60 = int_to_ptr.vmem [resolvable:$true] %s59
      %65 = dma.hbm_to_vmem [thread:$0]  %s58, 3072, %s60, [#allocation9], 64, 64, 4
    $region17: #{tpu_custom_call.1} parent=1 // pred_fallthru
      _
    // Predicated region
    $region18: #{tpu_custom_call.1} parent=1 // pred_check
      _
    $region19: #{tpu_custom_call.1} parent=1 // pred_check_branch
      %67 = sbr.rel (0) target = $region21
    $region20: #{tpu_custom_call.1} parent=1 // pred_region
      _
    $region21: #{tpu_custom_call.1} parent=1 // pred_fallthru
      _
    // Predicated region
    $region22: #{tpu_custom_call.1} parent=1 // pred_check
      _
    $region23: #{tpu_custom_call.1} parent=1 // pred_check_branch
      %69 = sbr.rel (0) target = $region25
    $region24: #{tpu_custom_call.1} parent=1 // pred_region
      %71 = vsyncadd [#allocation9], 0
      %s72 = sshll.u32 %s5, 4
      %s73 = int_to_ptr.hbm [resolvable:$true] %s72
      %s74 = sshll.u32 [#allocation10], 4
      %s75 = int_to_ptr.vmem [resolvable:$true] %s74
      %80 = dma.hbm_to_vmem [thread:$0]  %s73, 1024, %s75, [#allocation9], 64, 64, 4
    $region25: #{tpu_custom_call.1} parent=1 // pred_fallthru
      _
    // Predicated region
    $region26: #{tpu_custom_call.1} parent=1 // pred_check
      _
    $region27: #{tpu_custom_call.1} parent=1 // pred_check_branch
      %82 = sbr.rel (0) target = $region29
    $region28: #{tpu_custom_call.1} parent=1 // pred_region
      _
    $region29: #{tpu_custom_call.1} parent=1 // pred_fallthru
      _
    // Predicated region
    $region30: #{tpu_custom_call.1} parent=1 // pred_check
      _
    $region31: #{tpu_custom_call.1} parent=1 // pred_check_branch
      %84 = sbr.rel (0) target = $region33
    $region32: #{tpu_custom_call.1} parent=1 // pred_region
      %86 = dma.done [#allocation3], 768
    $region33: #{tpu_custom_call.1} parent=1 // pred_fallthru
      _
    // Predicated region
    $region34: #{tpu_custom_call.1} parent=1 // pred_check
      _
    $region35: #{tpu_custom_call.1} parent=1 // pred_check_branch
      %88 = sbr.rel (0) target = $region37
    $region36: #{tpu_custom_call.1} parent=1 // pred_region
      %90 = dma.done [#allocation6], 6144
    $region37: #{tpu_custom_call.1} parent=1 // pred_fallthru
      _
    // Predicated region
    $region38: #{tpu_custom_call.1} parent=1 // pred_check
      _
    $region39: #{tpu_custom_call.1} parent=1 // pred_check_branch
      %92 = sbr.rel (0) target = $region41
    $region40: #{tpu_custom_call.1} parent=1 // pred_region
      %94 = dma.done [#allocation6], 16
    $region41: #{tpu_custom_call.1} parent=1 // pred_fallthru
      _
    // Predicated region
    $region42: #{tpu_custom_call.1} parent=1 // pred_check
      _
    $region43: #{tpu_custom_call.1} parent=1 // pred_check_branch
      %96 = sbr.rel (0) target = $region45
    $region44: #{tpu_custom_call.1} parent=1 // pred_region
      %98 = dma.done [#allocation9], 3072
    $region45: #{tpu_custom_call.1} parent=1 // pred_fallthru
      _
    // Predicated region
    $region46: #{tpu_custom_call.1} parent=1 // pred_check
      _
    $region47: #{tpu_custom_call.1} parent=1 // pred_check_branch
      %100 = sbr.rel (0) target = $region49
    $region48: #{tpu_custom_call.1} parent=1 // pred_region
      %102 = dma.done [#allocation9], 1024
    $region49: #{tpu_custom_call.1} parent=1 // pred_fallthru
      _
    %v103 = vld [vmem:[#allocation2] sm:$0xff]
    %v104 = vld [vmem:[#allocation2 + $0x8] sm:$0xf]
    %v105 = vld [vmem:[#allocation2 + $0xc] sm:$0xff]
    %v106 = vld [vmem:[#allocation2 + $0x14] sm:$0xf]
    %v107 = vld [vmem:[#allocation2 + $0x18] sm:$0xff]
    %v108 = vld [vmem:[#allocation2 + $0x20] sm:$0xf]
    %v109 = vld [vmem:[#allocation2 + $0x24] sm:$0xff]
    %v110 = vld [vmem:[#allocation2 + $0x2c] sm:$0xf]
    %119 = vst [vmem:[#allocation1] ss:$4 sm:$0xff] %v103
    %s120 = scalar_lea.vmem [#allocation1], 1
    %121 = vst [vmem:[%s120] ss:$4 sm:$0xff] %v105
    %s122 = scalar_lea.vmem [#allocation1], 2
    %123 = vst [vmem:[%s122] ss:$4 sm:$0xff] %v107
    %s124 = scalar_lea.vmem [#allocation1], 3
    %125 = vst [vmem:[%s124] ss:$4 sm:$0xff] %v109
    %s126 = scalar_lea.vmem [#allocation1], 32
    %127 = vst [vmem:[%s126] ss:$4 sm:$0xff] %v104
    %s128 = scalar_lea.vmem [#allocation1], 33
    %129 = vst [vmem:[%s128] ss:$4 sm:$0xff] %v106
    %s130 = scalar_lea.vmem [#allocation1], 34
    %131 = vst [vmem:[%s130] ss:$4 sm:$0xff] %v108
    %s132 = scalar_lea.vmem [#allocation1], 35
    %133 = vst [vmem:[%s132] ss:$4 sm:$0xff] %v110
    %v134 = vld.sshfl [vmem:[#allocation1] sm:$0xff pattern:$0x73625140]
    %v135 = vld.sshfl [vmem:[#allocation1 + $0x8] sm:$0xff pattern:$0x73625140]
    %v136 = vld.sshfl [vmem:[#allocation1 + $0x10] sm:$0xff pattern:$0x73625140]
    %v137 = vld.sshfl [vmem:[#allocation1 + $0x18] sm:$0xff pattern:$0x73625140]
    %v138 = vld.sshfl [vmem:[#allocation1 + $0x20] sm:$0xff pattern:$0x73625140]
    %v139 = vld.sshfl [vmem:[#allocation1 + $0x28] sm:$0xff pattern:$0x73625140]
    %v146 = vpack.c.bf16 %v134, %v134
    %v147 = vpack.c.bf16 %v135, %v135
    %v148 = vpack.c.bf16 %v136, %v136
    %v149 = vpack.c.bf16 %v137, %v137
    %v150 = vpack.c.bf16 %v138, %v138
    %v151 = vpack.c.bf16 %v139, %v139
    %v152 = vld [vmem:[#allocation7] sm:$0x1]
    %v153 = vld [vmem:[%s4] sm:$0x1]
    %v154 = vld [vmem:[%s4 + $0x1] sm:$0x1]
    %v155 = vld [vmem:[%s4 + $0x2] sm:$0x1]
    %v156 = vld [vmem:[#allocation5] sm:$0xf]
    %v157 = vld [vmem:[#allocation5 + $0x4] sm:$0xf]
    %v158 = vld [vmem:[#allocation5 + $0x8] sm:$0xf]
    %v159 = vld [vmem:[#allocation5 + $0xc] sm:$0xf]
    %v160 = vld [vmem:[#allocation5 + $0x10] sm:$0xf]
    %v161 = vld [vmem:[#allocation5 + $0x14] sm:$0xf]
    %v162 = vld [vmem:[#allocation5 + $0x18] sm:$0xf]
    %v163 = vld [vmem:[#allocation5 + $0x1c] sm:$0xf]
    %v164 = vld [vmem:[#allocation5 + $0x20] sm:$0xf]
    %v165 = vld [vmem:[#allocation5 + $0x24] sm:$0xf]
    %v166 = vld [vmem:[#allocation5 + $0x28] sm:$0xf]
    %v167 = vld [vmem:[#allocation5 + $0x2c] sm:$0xf]
    %v168 = vld [vmem:[#allocation5 + $0x30] sm:$0xf]
    %v169 = vld [vmem:[#allocation5 + $0x34] sm:$0xf]
    %v170 = vld [vmem:[#allocation5 + $0x38] sm:$0xf]
    %v171 = vld [vmem:[#allocation5 + $0x3c] sm:$0xf]
    %v172 = vld [vmem:[#allocation5 + $0x40] sm:$0xf]
    %v173 = vld [vmem:[#allocation5 + $0x44] sm:$0xf]
    %v174 = vld [vmem:[#allocation5 + $0x48] sm:$0xf]
    %v175 = vld [vmem:[#allocation5 + $0x4c] sm:$0xf]
    %v176 = vld [vmem:[#allocation5 + $0x50] sm:$0xf]
    %v177 = vld [vmem:[#allocation5 + $0x54] sm:$0xf]
    %v178 = vld [vmem:[#allocation5 + $0x58] sm:$0xf]
    %v179 = vld [vmem:[#allocation5 + $0x5c] sm:$0xf]
    %v180 = vld [vmem:[#allocation5 + $0x60] sm:$0xf]
    %v181 = vld [vmem:[#allocation5 + $0x64] sm:$0xf]
    %v182 = vld [vmem:[#allocation5 + $0x68] sm:$0xf]
    %v183 = vld [vmem:[#allocation5 + $0x6c] sm:$0xf]
    %v184 = vld [vmem:[#allocation5 + $0x70] sm:$0xf]
    %v185 = vld [vmem:[#allocation5 + $0x74] sm:$0xf]
    %v186 = vld [vmem:[#allocation5 + $0x78] sm:$0xf]
    %v187 = vld [vmem:[#allocation5 + $0x7c] sm:$0xf]
    %v188 = vld [vmem:[#allocation5 + $0x80] sm:$0xf]
    %v189 = vld [vmem:[#allocation5 + $0x84] sm:$0xf]
    %v190 = vld [vmem:[#allocation5 + $0x88] sm:$0xf]
    %v191 = vld [vmem:[#allocation5 + $0x8c] sm:$0xf]
    %v192 = vld [vmem:[#allocation5 + $0x90] sm:$0xf]
    %v193 = vld [vmem:[#allocation5 + $0x94] sm:$0xf]
    %v194 = vld [vmem:[#allocation5 + $0x98] sm:$0xf]
    %v195 = vld [vmem:[#allocation5 + $0x9c] sm:$0xf]
    %v196 = vld [vmem:[#allocation5 + $0xa0] sm:$0xf]
    %v197 = vld [vmem:[#allocation5 + $0xa4] sm:$0xf]
    %v198 = vld [vmem:[#allocation5 + $0xa8] sm:$0xf]
    %v199 = vld [vmem:[#allocation5 + $0xac] sm:$0xf]
    %v200 = vld [vmem:[#allocation5 + $0xb0] sm:$0xf]
    %v201 = vld [vmem:[#allocation5 + $0xb4] sm:$0xf]
    %v202 = vld [vmem:[#allocation5 + $0xb8] sm:$0xf]
    %v203 = vld [vmem:[#allocation5 + $0xbc] sm:$0xf]
    %v204 = vld [vmem:[#allocation5 + $0xc0] sm:$0xf]
    %v205 = vld [vmem:[#allocation5 + $0xc4] sm:$0xf]
    %v206 = vld [vmem:[#allocation5 + $0xc8] sm:$0xf]
    %v207 = vld [vmem:[#allocation5 + $0xcc] sm:$0xf]
    %v208 = vld [vmem:[#allocation5 + $0xd0] sm:$0xf]
    %v209 = vld [vmem:[#allocation5 + $0xd4] sm:$0xf]
    %v210 = vld [vmem:[#allocation5 + $0xd8] sm:$0xf]
    %v211 = vld [vmem:[#allocation5 + $0xdc] sm:$0xf]
    %v212 = vld [vmem:[#allocation5 + $0xe0] sm:$0xf]
    %v213 = vld [vmem:[#allocation5 + $0xe4] sm:$0xf]
    %v214 = vld [vmem:[#allocation5 + $0xe8] sm:$0xf]
    %v215 = vld [vmem:[#allocation5 + $0xec] sm:$0xf]
    %v216 = vld [vmem:[#allocation5 + $0xf0] sm:$0xf]
    %v217 = vld [vmem:[#allocation5 + $0xf4] sm:$0xf]
    %v218 = vld [vmem:[#allocation5 + $0xf8] sm:$0xf]
    %v219 = vld [vmem:[#allocation5 + $0xfc] sm:$0xf]
    %v220 = vld [vmem:[#allocation5 + $0x100] sm:$0xf]
    %v221 = vld [vmem:[#allocation5 + $0x104] sm:$0xf]
    %v222 = vld [vmem:[#allocation5 + $0x108] sm:$0xf]
    %v223 = vld [vmem:[#allocation5 + $0x10c] sm:$0xf]
    %v224 = vld [vmem:[#allocation5 + $0x110] sm:$0xf]
    %v225 = vld [vmem:[#allocation5 + $0x114] sm:$0xf]
    %v226 = vld [vmem:[#allocation5 + $0x118] sm:$0xf]
    %v227 = vld [vmem:[#allocation5 + $0x11c] sm:$0xf]
    %v228 = vld [vmem:[#allocation5 + $0x120] sm:$0xf]
    %v229 = vld [vmem:[#allocation5 + $0x124] sm:$0xf]
    %v230 = vld [vmem:[#allocation5 + $0x128] sm:$0xf]
    %v231 = vld [vmem:[#allocation5 + $0x12c] sm:$0xf]
    %v232 = vld [vmem:[#allocation5 + $0x130] sm:$0xf]
    %v233 = vld [vmem:[#allocation5 + $0x134] sm:$0xf]
    %v234 = vld [vmem:[#allocation5 + $0x138] sm:$0xf]
    %v235 = vld [vmem:[#allocation5 + $0x13c] sm:$0xf]
    %v236 = vld [vmem:[#allocation5 + $0x140] sm:$0xf]
    %v237 = vld [vmem:[#allocation5 + $0x144] sm:$0xf]
    %v238 = vld [vmem:[#allocation5 + $0x148] sm:$0xf]
    %v239 = vld [vmem:[#allocation5 + $0x14c] sm:$0xf]
    %v240 = vld [vmem:[#allocation5 + $0x150] sm:$0xf]
    %v241 = vld [vmem:[#allocation5 + $0x154] sm:$0xf]
    %v242 = vld [vmem:[#allocation5 + $0x158] sm:$0xf]
    %v243 = vld [vmem:[#allocation5 + $0x15c] sm:$0xf]
    %v244 = vld [vmem:[#allocation5 + $0x160] sm:$0xf]
    %v245 = vld [vmem:[#allocation5 + $0x164] sm:$0xf]
    %v246 = vld [vmem:[#allocation5 + $0x168] sm:$0xf]
    %v247 = vld [vmem:[#allocation5 + $0x16c] sm:$0xf]
    %v248 = vld [vmem:[#allocation5 + $0x170] sm:$0xf]
    %v249 = vld [vmem:[#allocation5 + $0x174] sm:$0xf]
    %v250 = vld [vmem:[#allocation5 + $0x178] sm:$0xf]
    %v251 = vld [vmem:[#allocation5 + $0x17c] sm:$0xf]
    %v253 = vperm.slane %v152, 0
    %v351 = vunpack.c.l.b16 %v156
    %v352 = vunpack.c.l.b16 %v157
    %v353 = vunpack.c.l.b16 %v158
    %v354 = vunpack.c.l.b16 %v159
    %v355 = vunpack.c.l.b16 %v160
    %v356 = vunpack.c.l.b16 %v161
    %v357 = vunpack.c.l.b16 %v162
    %v358 = vunpack.c.l.b16 %v163
    %v359 = vunpack.c.l.b16 %v164
    %v360 = vunpack.c.l.b16 %v165
    %v361 = vunpack.c.l.b16 %v166
    %v362 = vunpack.c.l.b16 %v167
    %v363 = vunpack.c.l.b16 %v168
    %v364 = vunpack.c.l.b16 %v169
    %v365 = vunpack.c.l.b16 %v170
    %v366 = vunpack.c.l.b16 %v171
    %v367 = vunpack.c.l.b16 %v172
    %v368 = vunpack.c.l.b16 %v173
    %v369 = vunpack.c.l.b16 %v174
    %v370 = vunpack.c.l.b16 %v175
    %v371 = vunpack.c.l.b16 %v176
    %v372 = vunpack.c.l.b16 %v177
    %v373 = vunpack.c.l.b16 %v178
    %v374 = vunpack.c.l.b16 %v179
    %v375 = vunpack.c.l.b16 %v180
    %v376 = vunpack.c.l.b16 %v181
    %v377 = vunpack.c.l.b16 %v182
    %v378 = vunpack.c.l.b16 %v183
    %v379 = vunpack.c.l.b16 %v184
    %v380 = vunpack.c.l.b16 %v185
    %v381 = vunpack.c.l.b16 %v186
    %v382 = vunpack.c.l.b16 %v187
    %v383 = vunpack.c.l.b16 %v188
    %v384 = vunpack.c.l.b16 %v189
    %v385 = vunpack.c.l.b16 %v190
    %v386 = vunpack.c.l.b16 %v191
    %v387 = vunpack.c.l.b16 %v192
    %v388 = vunpack.c.l.b16 %v193
    %v389 = vunpack.c.l.b16 %v194
    %v390 = vunpack.c.l.b16 %v195
    %v391 = vunpack.c.l.b16 %v196
    %v392 = vunpack.c.l.b16 %v197
    %v393 = vunpack.c.l.b16 %v198
    %v394 = vunpack.c.l.b16 %v199
    %v395 = vunpack.c.l.b16 %v200
    %v396 = vunpack.c.l.b16 %v201
    %v397 = vunpack.c.l.b16 %v202
    %v398 = vunpack.c.l.b16 %v203
    %v399 = vunpack.c.l.b16 %v204
    %v400 = vunpack.c.l.b16 %v205
    %v401 = vunpack.c.l.b16 %v206
    %v402 = vunpack.c.l.b16 %v207
    %v403 = vunpack.c.l.b16 %v208
    %v404 = vunpack.c.l.b16 %v209
    %v405 = vunpack.c.l.b16 %v210
    %v406 = vunpack.c.l.b16 %v211
    %v407 = vunpack.c.l.b16 %v212
    %v408 = vunpack.c.l.b16 %v213
    %v409 = vunpack.c.l.b16 %v214
    %v410 = vunpack.c.l.b16 %v215
    %v411 = vunpack.c.l.b16 %v216
    %v412 = vunpack.c.l.b16 %v217
    %v413 = vunpack.c.l.b16 %v218
    %v414 = vunpack.c.l.b16 %v219
    %v415 = vunpack.c.l.b16 %v220
    %v416 = vunpack.c.l.b16 %v221
    %v417 = vunpack.c.l.b16 %v222
    %v418 = vunpack.c.l.b16 %v223
    %v419 = vunpack.c.l.b16 %v224
    %v420 = vunpack.c.l.b16 %v225
    %v421 = vunpack.c.l.b16 %v226
    %v422 = vunpack.c.l.b16 %v227
    %v423 = vunpack.c.l.b16 %v228
    %v424 = vunpack.c.l.b16 %v229
    %v425 = vunpack.c.l.b16 %v230
    %v426 = vunpack.c.l.b16 %v231
    %v427 = vunpack.c.l.b16 %v232
    %v428 = vunpack.c.l.b16 %v233
    %v429 = vunpack.c.l.b16 %v234
    %v430 = vunpack.c.l.b16 %v235
    %v431 = vunpack.c.l.b16 %v236
    %v432 = vunpack.c.l.b16 %v237
    %v433 = vunpack.c.l.b16 %v238
    %v434 = vunpack.c.l.b16 %v239
    %v435 = vunpack.c.l.b16 %v240
    %v436 = vunpack.c.l.b16 %v241
    %v437 = vunpack.c.l.b16 %v242
    %v438 = vunpack.c.l.b16 %v243
    %v439 = vunpack.c.l.b16 %v244
    %v440 = vunpack.c.l.b16 %v245
    %v441 = vunpack.c.l.b16 %v246
    %v442 = vunpack.c.l.b16 %v247
    %v443 = vunpack.c.l.b16 %v248
    %v444 = vunpack.c.l.b16 %v249
    %v445 = vunpack.c.l.b16 %v250
    %v446 = vunpack.c.l.b16 %v251
    %v447 = vpack.c.b16 %v352, %v351
    %v448 = vpack.c.b16 %v354, %v353
    %v449 = vpack.c.b16 %v356, %v355
    %v450 = vpack.c.b16 %v358, %v357
    %v451 = vpack.c.b16 %v360, %v359
    %v452 = vpack.c.b16 %v362, %v361
    %v453 = vpack.c.b16 %v364, %v363
    %v454 = vpack.c.b16 %v366, %v365
    %v455 = vpack.c.b16 %v368, %v367
    %v456 = vpack.c.b16 %v370, %v369
    %v457 = vpack.c.b16 %v372, %v371
    %v458 = vpack.c.b16 %v374, %v373
    %v459 = vpack.c.b16 %v376, %v375
    %v460 = vpack.c.b16 %v378, %v377
    %v461 = vpack.c.b16 %v380, %v379
    %v462 = vpack.c.b16 %v382, %v381
    %v463 = vpack.c.b16 %v384, %v383
    %v464 = vpack.c.b16 %v386, %v385
    %v465 = vpack.c.b16 %v388, %v387
    %v466 = vpack.c.b16 %v390, %v389
    %v467 = vpack.c.b16 %v392, %v391
    %v468 = vpack.c.b16 %v394, %v393
    %v469 = vpack.c.b16 %v396, %v395
    %v470 = vpack.c.b16 %v398, %v397
    %v471 = vpack.c.b16 %v400, %v399
    %v472 = vpack.c.b16 %v402, %v401
    %v473 = vpack.c.b16 %v404, %v403
    %v474 = vpack.c.b16 %v406, %v405
    %v475 = vpack.c.b16 %v408, %v407
    %v476 = vpack.c.b16 %v410, %v409
    %v477 = vpack.c.b16 %v412, %v411
    %v478 = vpack.c.b16 %v414, %v413
    %v479 = vpack.c.b16 %v416, %v415
    %v480 = vpack.c.b16 %v418, %v417
    %v481 = vpack.c.b16 %v420, %v419
    %v482 = vpack.c.b16 %v422, %v421
    %v483 = vpack.c.b16 %v424, %v423
    %v484 = vpack.c.b16 %v426, %v425
    %v485 = vpack.c.b16 %v428, %v427
    %v486 = vpack.c.b16 %v430, %v429
    %v487 = vpack.c.b16 %v432, %v431
    %v488 = vpack.c.b16 %v434, %v433
    %v489 = vpack.c.b16 %v436, %v435
    %v490 = vpack.c.b16 %v438, %v437
    %v491 = vpack.c.b16 %v440, %v439
    %v492 = vpack.c.b16 %v442, %v441
    %v493 = vpack.c.b16 %v444, %v443
    %v494 = vpack.c.b16 %v446, %v445
    %543 = vmatpush.bf16.msra.mxu0 %v454
    %544 = vmatpush.bf16.msra.mxu0 %v453
    %545 = vmatpush.bf16.msra.mxu0 %v452
    %546 = vmatpush.bf16.msra.mxu0 %v451
    %547 = vmatpush.bf16.msra.mxu0 %v450
    %548 = vmatpush.bf16.msra.mxu0 %v449
    %549 = vmatpush.bf16.msra.mxu0 %v448
    %550 = vmatpush.bf16.msra.mxu0 %v447
    %551 = vmatmul.bf16.gmra.mxu0 %v146
    %v552 = vpop.f32.mrf.mxu0
    %v553 = vadd.f32 %v253, %v552
    %v554 = vpop.f32.mrf.mxu0
    %555 = vdwg.mxu0
    %556 = vmatpush.bf16.msra.mxu0 %v462
    %557 = vmatpush.bf16.msra.mxu0 %v461
    %558 = vmatpush.bf16.msra.mxu0 %v460
    %559 = vmatpush.bf16.msra.mxu0 %v459
    %560 = vmatpush.bf16.msra.mxu0 %v458
    %561 = vmatpush.bf16.msra.mxu0 %v457
    %562 = vmatpush.bf16.msra.mxu0 %v456
    %563 = vmatpush.bf16.msra.mxu0 %v455
    %564 = vmatmul.bf16.gmra.mxu0 %v147
    %v565 = vpop.f32.mrf.mxu0
    %v566 = vadd.f32 %v553, %v565
    %v567 = vpop.f32.mrf.mxu0
    %568 = vdwg.mxu0
    %569 = vmatpush.bf16.msra.mxu0 %v470
    %570 = vmatpush.bf16.msra.mxu0 %v469
    %571 = vmatpush.bf16.msra.mxu0 %v468
    %572 = vmatpush.bf16.msra.mxu0 %v467
    %573 = vmatpush.bf16.msra.mxu0 %v466
    %574 = vmatpush.bf16.msra.mxu0 %v465
    %575 = vmatpush.bf16.msra.mxu0 %v464
    %576 = vmatpush.bf16.msra.mxu0 %v463
    %577 = vmatmul.bf16.gmra.mxu0 %v148
    %v578 = vpop.f32.mrf.mxu0
    %v579 = vadd.f32 %v566, %v578
    %v580 = vpop.f32.mrf.mxu0
    %581 = vdwg.mxu0
    %582 = vmatpush.bf16.msra.mxu0 %v478
    %583 = vmatpush.bf16.msra.mxu0 %v477
    %584 = vmatpush.bf16.msra.mxu0 %v476
    %585 = vmatpush.bf16.msra.mxu0 %v475
    %586 = vmatpush.bf16.msra.mxu0 %v474
    %587 = vmatpush.bf16.msra.mxu0 %v473
    %588 = vmatpush.bf16.msra.mxu0 %v472
    %589 = vmatpush.bf16.msra.mxu0 %v471
    %590 = vmatmul.bf16.gmra.mxu0 %v149
    %v591 = vpop.f32.mrf.mxu0
    %v592 = vadd.f32 %v579, %v591
    %v593 = vpop.f32.mrf.mxu0
    %594 = vdwg.mxu0
    %595 = vmatpush.bf16.msra.mxu0 %v486
    %596 = vmatpush.bf16.msra.mxu0 %v485
    %597 = vmatpush.bf16.msra.mxu0 %v484
    %598 = vmatpush.bf16.msra.mxu0 %v483
    %599 = vmatpush.bf16.msra.mxu0 %v482
    %600 = vmatpush.bf16.msra.mxu0 %v481
    %601 = vmatpush.bf16.msra.mxu0 %v480
    %602 = vmatpush.bf16.msra.mxu0 %v479
    %603 = vmatmul.bf16.gmra.mxu0 %v150
    %v604 = vpop.f32.mrf.mxu0
    %v605 = vadd.f32 %v592, %v604
    %v606 = vpop.f32.mrf.mxu0
    %607 = vdwg.mxu0
    %608 = vmatpush.bf16.msra.mxu0 %v494
    %609 = vmatpush.bf16.msra.mxu0 %v493
    %610 = vmatpush.bf16.msra.mxu0 %v492
    %611 = vmatpush.bf16.msra.mxu0 %v491
    %612 = vmatpush.bf16.msra.mxu0 %v490
    %613 = vmatpush.bf16.msra.mxu0 %v489
    %614 = vmatpush.bf16.msra.mxu0 %v488
    %615 = vmatpush.bf16.msra.mxu0 %v487
    %616 = vmatmul.bf16.gmra.mxu0 %v151
    %v617 = vpop.f32.mrf.mxu0
    %v618 = vadd.f32 %v605, %v617
    %v619 = vpop.f32.mrf.mxu0
    %620 = vdwg.mxu0
    %v621 = vmax.f32 %v618, 0.0
    %v622 = vpack.c.bf16 %v621, %v621
    %v623 = vld [vmem:[#allocation8] sm:$0xf]
    %v624 = vld [vmem:[#allocation8 + $0x4] sm:$0xf]
    %v625 = vld [vmem:[#allocation8 + $0x8] sm:$0xf]
    %v626 = vld [vmem:[#allocation8 + $0xc] sm:$0xf]
    %v627 = vld [vmem:[#allocation8 + $0x10] sm:$0xf]
    %v628 = vld [vmem:[#allocation8 + $0x14] sm:$0xf]
    %v629 = vld [vmem:[#allocation8 + $0x18] sm:$0xf]
    %v630 = vld [vmem:[#allocation8 + $0x1c] sm:$0xf]
    %v631 = vld [vmem:[#allocation8 + $0x20] sm:$0xf]
    %v632 = vld [vmem:[#allocation8 + $0x24] sm:$0xf]
    %v633 = vld [vmem:[#allocation8 + $0x28] sm:$0xf]
    %v634 = vld [vmem:[#allocation8 + $0x2c] sm:$0xf]
    %v635 = vld [vmem:[#allocation8 + $0x30] sm:$0xf]
    %v636 = vld [vmem:[#allocation8 + $0x34] sm:$0xf]
    %v637 = vld [vmem:[#allocation8 + $0x38] sm:$0xf]
    %v638 = vld [vmem:[#allocation8 + $0x3c] sm:$0xf]
    %v640 = vperm.slane %v153, 0
    %v658 = vunpack.c.l.b16 %v623
    %v659 = vunpack.c.l.b16 %v624
    %v660 = vunpack.c.l.b16 %v625
    %v661 = vunpack.c.l.b16 %v626
    %v662 = vunpack.c.l.b16 %v627
    %v663 = vunpack.c.l.b16 %v628
    %v664 = vunpack.c.l.b16 %v629
    %v665 = vunpack.c.l.b16 %v630
    %v666 = vunpack.c.l.b16 %v631
    %v667 = vunpack.c.l.b16 %v632
    %v668 = vunpack.c.l.b16 %v633
    %v669 = vunpack.c.l.b16 %v634
    %v670 = vunpack.c.l.b16 %v635
    %v671 = vunpack.c.l.b16 %v636
    %v672 = vunpack.c.l.b16 %v637
    %v673 = vunpack.c.l.b16 %v638
    %v674 = vpack.c.b16 %v659, %v658
    %v675 = vpack.c.b16 %v661, %v660
    %v676 = vpack.c.b16 %v663, %v662
    %v677 = vpack.c.b16 %v665, %v664
    %v678 = vpack.c.b16 %v667, %v666
    %v679 = vpack.c.b16 %v669, %v668
    %v680 = vpack.c.b16 %v671, %v670
    %v681 = vpack.c.b16 %v673, %v672
    %690 = vmatpush.bf16.msra.mxu0 %v681
    %691 = vmatpush.bf16.msra.mxu0 %v680
    %692 = vmatpush.bf16.msra.mxu0 %v679
    %693 = vmatpush.bf16.msra.mxu0 %v678
    %694 = vmatpush.bf16.msra.mxu0 %v677
    %695 = vmatpush.bf16.msra.mxu0 %v676
    %696 = vmatpush.bf16.msra.mxu0 %v675
    %697 = vmatpush.bf16.msra.mxu0 %v674
    %698 = vmatmul.bf16.gmra.mxu0 %v622
    %v699 = vpop.f32.mrf.mxu0
    %v700 = vadd.f32 %v640, %v699
    %v701 = vpop.f32.mrf.mxu0
    %702 = vdwg.mxu0
    %v703 = vmax.f32 %v700, 0.0
    %v704 = vadd.f32 %v621, %v703
    %v705 = vpack.c.bf16 %v704, %v704
    %s706 = scalar_lea.vmem [#allocation8], 64
    %v707 = vld [vmem:[%s706] sm:$0xf]
    %v708 = vld [vmem:[%s706 + $0x4] sm:$0xf]
    %v709 = vld [vmem:[%s706 + $0x8] sm:$0xf]
    %v710 = vld [vmem:[%s706 + $0xc] sm:$0xf]
    %v711 = vld [vmem:[%s706 + $0x10] sm:$0xf]
    %v712 = vld [vmem:[%s706 + $0x14] sm:$0xf]
    %v713 = vld [vmem:[%s706 + $0x18] sm:$0xf]
    %v714 = vld [vmem:[%s706 + $0x1c] sm:$0xf]
    %v715 = vld [vmem:[%s706 + $0x20] sm:$0xf]
    %v716 = vld [vmem:[%s706 + $0x24] sm:$0xf]
    %v717 = vld [vmem:[%s706 + $0x28] sm:$0xf]
    %v718 = vld [vmem:[%s706 + $0x2c] sm:$0xf]
    %v719 = vld [vmem:[%s706 + $0x30] sm:$0xf]
    %v720 = vld [vmem:[%s706 + $0x34] sm:$0xf]
    %v721 = vld [vmem:[%s706 + $0x38] sm:$0xf]
    %v722 = vld [vmem:[%s706 + $0x3c] sm:$0xf]
    %v724 = vperm.slane %v154, 0
    %v742 = vunpack.c.l.b16 %v707
    %v743 = vunpack.c.l.b16 %v708
    %v744 = vunpack.c.l.b16 %v709
    %v745 = vunpack.c.l.b16 %v710
    %v746 = vunpack.c.l.b16 %v711
    %v747 = vunpack.c.l.b16 %v712
    %v748 = vunpack.c.l.b16 %v713
    %v749 = vunpack.c.l.b16 %v714
    %v750 = vunpack.c.l.b16 %v715
    %v751 = vunpack.c.l.b16 %v716
    %v752 = vunpack.c.l.b16 %v717
    %v753 = vunpack.c.l.b16 %v718
    %v754 = vunpack.c.l.b16 %v719
    %v755 = vunpack.c.l.b16 %v720
    %v756 = vunpack.c.l.b16 %v721
    %v757 = vunpack.c.l.b16 %v722
    %v758 = vpack.c.b16 %v743, %v742
    %v759 = vpack.c.b16 %v745, %v744
    %v760 = vpack.c.b16 %v747, %v746
    %v761 = vpack.c.b16 %v749, %v748
    %v762 = vpack.c.b16 %v751, %v750
    %v763 = vpack.c.b16 %v753, %v752
    %v764 = vpack.c.b16 %v755, %v754
    %v765 = vpack.c.b16 %v757, %v756
    %774 = vmatpush.bf16.msra.mxu0 %v765
    %775 = vmatpush.bf16.msra.mxu0 %v764
    %776 = vmatpush.bf16.msra.mxu0 %v763
    %777 = vmatpush.bf16.msra.mxu0 %v762
    %778 = vmatpush.bf16.msra.mxu0 %v761
    %779 = vmatpush.bf16.msra.mxu0 %v760
    %780 = vmatpush.bf16.msra.mxu0 %v759
    %781 = vmatpush.bf16.msra.mxu0 %v758
    %782 = vmatmul.bf16.gmra.mxu0 %v705
    %v783 = vpop.f32.mrf.mxu0
    %v784 = vadd.f32 %v724, %v783
    %v785 = vpop.f32.mrf.mxu0
    %786 = vdwg.mxu0
    %v787 = vmax.f32 %v784, 0.0
    %v788 = vadd.f32 %v704, %v787
    %v789 = vpack.c.bf16 %v788, %v788
    %s790 = scalar_lea.vmem [#allocation8], 128
    %v791 = vld [vmem:[%s790] sm:$0xf]
    %v792 = vld [vmem:[%s790 + $0x4] sm:$0xf]
    %v793 = vld [vmem:[%s790 + $0x8] sm:$0xf]
    %v794 = vld [vmem:[%s790 + $0xc] sm:$0xf]
    %v795 = vld [vmem:[%s790 + $0x10] sm:$0xf]
    %v796 = vld [vmem:[%s790 + $0x14] sm:$0xf]
    %v797 = vld [vmem:[%s790 + $0x18] sm:$0xf]
    %v798 = vld [vmem:[%s790 + $0x1c] sm:$0xf]
    %v799 = vld [vmem:[%s790 + $0x20] sm:$0xf]
    %v800 = vld [vmem:[%s790 + $0x24] sm:$0xf]
    %v801 = vld [vmem:[%s790 + $0x28] sm:$0xf]
    %v802 = vld [vmem:[%s790 + $0x2c] sm:$0xf]
    %v803 = vld [vmem:[%s790 + $0x30] sm:$0xf]
    %v804 = vld [vmem:[%s790 + $0x34] sm:$0xf]
    %v805 = vld [vmem:[%s790 + $0x38] sm:$0xf]
    %v806 = vld [vmem:[%s790 + $0x3c] sm:$0xf]
    %v808 = vperm.slane %v155, 0
    %v826 = vunpack.c.l.b16 %v791
    %v827 = vunpack.c.l.b16 %v792
    %v828 = vunpack.c.l.b16 %v793
    %v829 = vunpack.c.l.b16 %v794
    %v830 = vunpack.c.l.b16 %v795
    %v831 = vunpack.c.l.b16 %v796
    %v832 = vunpack.c.l.b16 %v797
    %v833 = vunpack.c.l.b16 %v798
    %v834 = vunpack.c.l.b16 %v799
    %v835 = vunpack.c.l.b16 %v800
    %v836 = vunpack.c.l.b16 %v801
    %v837 = vunpack.c.l.b16 %v802
    %v838 = vunpack.c.l.b16 %v803
    %v839 = vunpack.c.l.b16 %v804
    %v840 = vunpack.c.l.b16 %v805
    %v841 = vunpack.c.l.b16 %v806
    %v842 = vpack.c.b16 %v827, %v826
    %v843 = vpack.c.b16 %v829, %v828
    %v844 = vpack.c.b16 %v831, %v830
    %v845 = vpack.c.b16 %v833, %v832
    %v846 = vpack.c.b16 %v835, %v834
    %v847 = vpack.c.b16 %v837, %v836
    %v848 = vpack.c.b16 %v839, %v838
    %v849 = vpack.c.b16 %v841, %v840
    %858 = vmatpush.bf16.msra.mxu0 %v849
    %859 = vmatpush.bf16.msra.mxu0 %v848
    %860 = vmatpush.bf16.msra.mxu0 %v847
    %861 = vmatpush.bf16.msra.mxu0 %v846
    %862 = vmatpush.bf16.msra.mxu0 %v845
    %863 = vmatpush.bf16.msra.mxu0 %v844
    %864 = vmatpush.bf16.msra.mxu0 %v843
    %865 = vmatpush.bf16.msra.mxu0 %v842
    %866 = vmatmul.bf16.gmra.mxu0 %v789
    %v867 = vpop.f32.mrf.mxu0
    %v868 = vadd.f32 %v808, %v867
    %v869 = vpop.f32.mrf.mxu0
    %870 = vdwg.mxu0
    %v871 = vmax.f32 %v868, 0.0
    %v872 = vadd.f32 %v788, %v871
    %v873 = vpack.c.bf16 %v872, %v872
    %v874 = vld [vmem:[#allocation10] sm:$0xf]
    %v875 = vld [vmem:[#allocation10 + $0x4] sm:$0xf]
    %v876 = vld [vmem:[#allocation10 + $0x8] sm:$0xf]
    %v877 = vld [vmem:[#allocation10 + $0xc] sm:$0xf]
    %v878 = vld [vmem:[#allocation10 + $0x10] sm:$0xf]
    %v879 = vld [vmem:[#allocation10 + $0x14] sm:$0xf]
    %v880 = vld [vmem:[#allocation10 + $0x18] sm:$0xf]
    %v881 = vld [vmem:[#allocation10 + $0x1c] sm:$0xf]
    %v882 = vld [vmem:[#allocation10 + $0x20] sm:$0xf]
    %v883 = vld [vmem:[#allocation10 + $0x24] sm:$0xf]
    %v884 = vld [vmem:[#allocation10 + $0x28] sm:$0xf]
    %v885 = vld [vmem:[#allocation10 + $0x2c] sm:$0xf]
    %v886 = vld [vmem:[#allocation10 + $0x30] sm:$0xf]
    %v887 = vld [vmem:[#allocation10 + $0x34] sm:$0xf]
    %v888 = vld [vmem:[#allocation10 + $0x38] sm:$0xf]
    %v889 = vld [vmem:[#allocation10 + $0x3c] sm:$0xf]
    %v890 = vld [vmem:[%s6] sm:$0x1]
    %v892 = vperm.slane %v890, 0
    %v910 = vunpack.c.l.b16 %v874
    %v911 = vunpack.c.l.b16 %v875
    %v912 = vunpack.c.l.b16 %v876
    %v913 = vunpack.c.l.b16 %v877
    %v914 = vunpack.c.l.b16 %v878
    %v915 = vunpack.c.l.b16 %v879
    %v916 = vunpack.c.l.b16 %v880
    %v917 = vunpack.c.l.b16 %v881
    %v918 = vunpack.c.l.b16 %v882
    %v919 = vunpack.c.l.b16 %v883
    %v920 = vunpack.c.l.b16 %v884
    %v921 = vunpack.c.l.b16 %v885
    %v922 = vunpack.c.l.b16 %v886
    %v923 = vunpack.c.l.b16 %v887
    %v924 = vunpack.c.l.b16 %v888
    %v925 = vunpack.c.l.b16 %v889
    %v926 = vpack.c.b16 %v911, %v910
    %v927 = vpack.c.b16 %v913, %v912
    %v928 = vpack.c.b16 %v915, %v914
    %v929 = vpack.c.b16 %v917, %v916
    %v930 = vpack.c.b16 %v919, %v918
    %v931 = vpack.c.b16 %v921, %v920
    %v932 = vpack.c.b16 %v923, %v922
    %v933 = vpack.c.b16 %v925, %v924
    %942 = vmatpush.bf16.msra.mxu0 %v933
    %943 = vmatpush.bf16.msra.mxu0 %v932
    %944 = vmatpush.bf16.msra.mxu0 %v931
    %945 = vmatpush.bf16.msra.mxu0 %v930
    %946 = vmatpush.bf16.msra.mxu0 %v929
    %947 = vmatpush.bf16.msra.mxu0 %v928
    %948 = vmatpush.bf16.msra.mxu0 %v927
    %949 = vmatpush.bf16.msra.mxu0 %v926
    %950 = vmatmul.bf16.gmra.mxu0 %v873
    %v951 = vpop.f32.mrf.mxu0
    %v952 = vadd.f32 %v892, %v951
    %v953 = vpop.f32.mrf.mxu0
    %954 = vdwg.mxu0
    %v955 = vpack.c.bf16 %v952, %v952
    %v957 = vrot.slane %v955, 3
    %vm958 = vcmask 1040384
    %v961 = vsel %vm958, %v955, %v957
    %vm962 = vcmask 1041409
    %v963 = vsel %vm962, %v955, %v957
    %v965 = vrot.slane %v963, 1
    %vm966 = vcmask 1042434
    %v967 = vsel %vm966, %v955, %v957
    %v969 = vrot.slane %v967, 2
    %vm970 = vcmask 1043459
    %v971 = vsel %vm970, %v955, %v957
    %v973 = vrot.slane %v971, 3
    %978 = vst [vmem:[#allocation11] sm:$0x1] %v961
    %979 = vst [vmem:[#allocation11 + $0x1] sm:$0x1] %v965
    %980 = vst [vmem:[#allocation11 + $0x2] sm:$0x1] %v969
    %981 = vst [vmem:[#allocation11 + $0x3] sm:$0x1] %v973
    // Predicated region
    $region50: #{tpu_custom_call.1} parent=1 // pred_check
      _
    $region51: #{tpu_custom_call.1} parent=1 // pred_check_branch
      %983 = sbr.rel (0) target = $region53
    $region52: #{tpu_custom_call.1} parent=1 // pred_region
      %985 = vsyncadd [#allocation4], 48
      %s986 = sshll.u32 [#allocation11], 4
      %s987 = int_to_ptr.vmem [resolvable:$true] %s986
      %s988 = sshll.u32 %s7, 4
      %s989 = int_to_ptr.hbm [resolvable:$true] %s988
      %994 = dma.vmem_to_hbm [thread:$0]  %s987, 16, %s989, [#allocation4], 16, 16, 1
    $region53: #{tpu_custom_call.1} parent=1 // pred_fallthru
      _
    // Predicated region
    $region54: #{tpu_custom_call.1} parent=1 // pred_check
      _
    $region55: #{tpu_custom_call.1} parent=1 // pred_check_branch
      %996 = sbr.rel (0) target = $region57
    $region56: #{tpu_custom_call.1} parent=1 // pred_region
      %998 = dma.done [#allocation4], 64
    $region57: #{tpu_custom_call.1} parent=1 // pred_fallthru
      _
    %999 = vsyncpa [#allocation3], 1
    %1000 = vsyncpa [#allocation6], 1
    %1001 = vsyncpa [#allocation9], 1
    %1002 = vsyncpa [#allocation4], 1

</llo_original>
